<compile_context>
chip_gen: v6e
topology: v6e:2x2x1
jax: 0.10.0
libtpu: 0.0.40
codegen_flags: <defaults>
</compile_context>

<pallas_src>
import functools

import jax
import jax.numpy as jnp
import numpy as np
from jax.experimental import pallas as pl
from jax.experimental.pallas import tpu as pltpu

C_IN = 853            # Conv1d in_channels
C_OUT = 32            # Conv1d out_channels
KSIZE = 8             # Conv1d kernel_size
POOLED = C_OUT // 2   # 16 -> fc1 input
H1 = 10               # fc1 output
H2 = 1                # fc2 output

N_PACK = KSIZE * C_OUT   # 256: all 8 taps packed into the MXU lane dimension
HALO = 8                 # lookahead rows for taps 1..7 (rounded up to a sublane group)


def _round_up(x, m):
    return (x + m - 1) // m * m


def net_kernel(x0_ref, x1_ref, wp_ref, bc_ref, w1_ref, b1_ref, w2_ref, b2_ref,
               o_ref, y_ref):
    """One row tile of the fused conv1d + maxpool + fc1 + fc2 pipeline.

    x0_ref: (tile_t, 853) f32   activation rows of this tile
    x1_ref: (HALO, 853)   f32   next 8 rows (tap overlap across tiles)
    wp_ref: (853, 256)    bf16  conv weights, 8 taps packed on lanes
    y_ref : (tile_t+HALO, 256) f32 VMEM scratch for the per-tap matmul results
    o_ref : (tile_t, 1)   f32   sigmoid(fc2(...)) for this tile
    """
    tile_t = o_ref.shape[0]
    wp = wp_ref[...]

    # Conv1d(853->32, k=8) as one wide bf16 MXU matmul (256 = 8 taps x 32 ch),
    # f32 accumulation; activations are cast to bf16 in-kernel (no HBM copy).
    y_ref[0:tile_t, :] = jnp.dot(x0_ref[...].astype(jnp.bfloat16), wp,
                                 preferred_element_type=jnp.float32)
    y_ref[tile_t:tile_t + HALO, :] = jnp.dot(x1_ref[...].astype(jnp.bfloat16), wp,
                                             preferred_element_type=jnp.float32)

    # Tap reduction: conv[t, c] = sum_k y[t + k, k*32 + c].  Shifted slices are
    # read straight from the VMEM scratch Ref (no concatenated value is built).
    conv = y_ref[0:tile_t, 0:C_OUT]
    for k in range(1, KSIZE):
        conv = conv + y_ref[k:k + tile_t, k * C_OUT:(k + 1) * C_OUT]
    conv = jnp.maximum(conv + bc_ref[...], 0.0)                  # (tile_t, 32) [even|odd]

    # MaxPool1d(kernel_size=2) over adjacent channels == max(even, odd) halves.
    pooled = jnp.maximum(conv[:, :POOLED], conv[:, POOLED:])     # (tile_t, 16)

    # fc1 + ReLU (tiny f32 matmul).
    h = jnp.maximum(
        jnp.dot(pooled, w1_ref[...], preferred_element_type=jnp.float32)
        + b1_ref[...], 0.0)                                      # (tile_t, 10)

    # Dropout(p=0.5) is the identity at inference time.
    # TODO(synk): training-mode dropout (Bernoulli mask via pltpu PRNG) not implemented.

    # fc2 (10 -> 1) as broadcast-multiply + lane reduction, then sigmoid.
    # Output is a single real column -- no lane-padded junk writeback.
    z = jnp.sum(h * w2_ref[...], axis=1, keepdims=True) + b2_ref[...]
    o_ref[...] = jax.nn.sigmoid(z)                               # (tile_t, 1)


def init_params(key):
    """Deterministic parameter init (shapes match the PyTorch module)."""
    k1, k2, k3, k4, k5, k6 = jax.random.split(key, 6)
    fan_conv = C_IN * KSIZE
    b = 1.0 / np.sqrt(fan_conv)
    w_conv = jax.random.uniform(k1, (C_OUT, C_IN, KSIZE), jnp.float32, -b, b)
    b_conv = jax.random.uniform(k2, (C_OUT,), jnp.float32, -b, b)
    b1s = 1.0 / np.sqrt(POOLED)
    w_fc1 = jax.random.uniform(k3, (H1, POOLED), jnp.float32, -b1s, b1s)
    b_fc1 = jax.random.uniform(k4, (H1,), jnp.float32, -b1s, b1s)
    b2s = 1.0 / np.sqrt(H1)
    w_fc2 = jax.random.uniform(k5, (H2, H1), jnp.float32, -b2s, b2s)
    b_fc2 = jax.random.uniform(k6, (H2,), jnp.float32, -b2s, b2s)
    return w_conv, b_conv, w_fc1, b_fc1, w_fc2, b_fc2


@functools.partial(jax.jit, static_argnames=("tile_t",))
def net_forward(x, params, *, tile_t=1024):
    """x: (L, C_IN) float32; returns (L - KSIZE + 1, 1) float32."""
    w_conv, b_conv, w_fc1, b_fc1, w_fc2, b_fc2 = params
    L = x.shape[0]
    T = L - KSIZE + 1
    assert x.shape[1] == C_IN
    assert T >= 1, "sequence length must be >= kernel_size"
    x = x.astype(jnp.float32)

    # Row-tile size: multiple of 16, clamped so short/medium sequences still get
    # >= 2 grid steps (megacore sharding on v7x); large tiles for long L.
    tile_t = max(16, min(_round_up(tile_t, 16), _round_up(pl.cdiv(T, 2), 16)))
    num_tiles = pl.cdiv(T, tile_t)
    t_pad = num_tiles * tile_t
    blk_h = tile_t // HALO
    halo_max = pl.cdiv(L, HALO) - 1      # last HALO-row block that starts in bounds

    # --- conv weight packing (tiny, done once) --------------------------------
    # Channel order [even | odd] so MaxPool1d(2) becomes an elementwise max;
    # all 8 taps packed along the lane dim -> (853, 256), bf16.
    order = jnp.concatenate([jnp.arange(0, C_OUT, 2), jnp.arange(1, C_OUT, 2)])
    w_r = w_conv[order]                                         # (32, 853, 8)
    w_pack = jnp.transpose(w_r, (1, 2, 0)).reshape(C_IN, N_PACK).astype(jnp.bfloat16)
    b_c = b_conv[order].reshape(1, C_OUT).astype(jnp.float32)

    w1 = w_fc1.T.astype(jnp.float32)                            # (16, 10)
    b1 = b_fc1.reshape(1, H1).astype(jnp.float32)
    w2 = w_fc2.reshape(1, H1).astype(jnp.float32)               # (1, 10)
    b2 = b_fc2.reshape(1, H2).astype(jnp.float32)               # (1, 1)

    # --- index maps ------------------------------------------------------------
    def row_map(i):
        return i, 0

    def halo_map(i):
        # 8-row sliver right after tile i; clamped so the block never starts past
        # the array.  When the clamp is active the halo is only consumed by
        # output rows >= T, which the wrapper slices off.
        return jnp.minimum((i + 1) * blk_h, halo_max), 0

    def const_map(i):
        return 0, 0

    flops = (2 * (t_pad + HALO * num_tiles) * C_IN * N_PACK
             + 2 * t_pad * POOLED * H1 + 2 * t_pad * H1)
    bytes_accessed = (t_pad * C_IN * 4 + num_tiles * HALO * C_IN * 4
                      + C_IN * N_PACK * 2 + t_pad * 4)
    cost = pl.CostEstimate(flops=flops, transcendentals=t_pad,
                           bytes_accessed=bytes_accessed)

    out = pl.pallas_call(
        net_kernel,
        out_shape=jax.ShapeDtypeStruct((t_pad, H2), jnp.float32),
        grid=(num_tiles,),
        in_specs=[
            pl.BlockSpec((tile_t, C_IN), row_map),       # x rows for this tile (f32)
            pl.BlockSpec((HALO, C_IN), halo_map),        # 8-row overlap (taps 1..7)
            pl.BlockSpec((C_IN, N_PACK), const_map),     # packed conv weights (bf16)
            pl.BlockSpec((1, C_OUT), const_map),         # conv bias ([even|odd])
            pl.BlockSpec((POOLED, H1), const_map),       # fc1 weight
            pl.BlockSpec((1, H1), const_map),            # fc1 bias
            pl.BlockSpec((1, H1), const_map),            # fc2 weight row
            pl.BlockSpec((1, H2), const_map),            # fc2 bias
        ],
        out_specs=pl.BlockSpec((tile_t, H2), row_map),
        scratch_shapes=[pltpu.VMEM((tile_t + HALO, N_PACK), jnp.float32)],
        compiler_params=pltpu.CompilerParams(
            dimension_semantics=("parallel",),
            vmem_limit_bytes=32 * 1024 * 1024),
        cost_estimate=cost,
    )(x, x, w_pack, b_c, w1, b1, w2, b2)

    return out[:T]


def net_forward_ref(x, params, *, bf16_conv=False):
    """Pure-JAX reference. bf16_conv=True mirrors the kernel's bf16 conv inputs."""
    w_conv, b_conv, w_fc1, b_fc1, w_fc2, b_fc2 = params
    if bf16_conv:
        x = x.astype(jnp.bfloat16).astype(jnp.float32)
        w_conv = w_conv.astype(jnp.bfloat16).astype(jnp.float32)
    L = x.shape[0]
    T = L - KSIZE + 1
    idx = jnp.arange(T)[:, None] + jnp.arange(KSIZE)[None, :]
    patches = jnp.transpose(x[idx], (0, 2, 1)).reshape(T, C_IN * KSIZE)
    conv = jnp.maximum(patches @ w_conv.reshape(C_OUT, -1).T + b_conv, 0.0)
    pooled = jnp.maximum(conv[:, 0::2], conv[:, 1::2])
    h = jnp.maximum(pooled @ w_fc1.T + b_fc1, 0.0)
    return jax.nn.sigmoid(h @ w_fc2.T + b_fc2)


if __name__ == "__main__":
    key = jax.random.PRNGKey(0)
    kx1, kx2, kp = jax.random.split(key, 3)
    params = init_params(kp)

    # --- small single-tile check ---------------------------------------------
    L1 = 16
    x1 = jax.random.normal(kx1, (L1, C_IN), dtype=jnp.float32)   # (16, 853)
    out1 = jax.block_until_ready(net_forward(x1, params))
    assert out1.shape == (L1 - KSIZE + 1, 1), out1.shape
    ref1_bf16 = net_forward_ref(x1, params, bf16_conv=True)
    ref1_f32 = net_forward_ref(x1, params, bf16_conv=False)
    np.testing.assert_allclose(np.asarray(out1), np.asarray(ref1_bf16),
                               rtol=2e-3, atol=2e-4)
    np.testing.assert_allclose(np.asarray(out1), np.asarray(ref1_f32),
                               rtol=5e-2, atol=3e-2)

    # --- multi-tile check (row grid, halo across tiles, clamped last halo) ----
    L2 = 300
    x2 = jax.random.normal(kx2, (L2, C_IN), dtype=jnp.float32)   # (300, 853)
    out2 = jax.block_until_ready(net_forward(x2, params))
    assert out2.shape == (L2 - KSIZE + 1, 1), out2.shape
    ref2 = net_forward_ref(x2, params, bf16_conv=True)
    np.testing.assert_allclose(np.asarray(out2), np.asarray(ref2),
                               rtol=2e-3, atol=2e-4)

    print("KERNEL_OK")
</pallas_src>

<mosaic_0001>
module attributes {stable_mosaic.version = 11 : i64} {
  func.func @net_kernel(%arg0: i32, %arg1: memref<16x853xf32, #tpu.memory_space<vmem>>, %arg2: memref<8x853xf32, #tpu.memory_space<vmem>>, %arg3: memref<853x256xbf16, #tpu.memory_space<vmem>>, %arg4: memref<1x32xf32, #tpu.memory_space<vmem>>, %arg5: memref<16x10xf32, #tpu.memory_space<vmem>>, %arg6: memref<1x10xf32, #tpu.memory_space<vmem>>, %arg7: memref<1x10xf32, #tpu.memory_space<vmem>>, %arg8: memref<1x1xf32, #tpu.memory_space<vmem>>, %arg9: memref<16x1xf32, #tpu.memory_space<vmem>>, %arg10: memref<24x256xf32, #tpu.memory_space<vmem>>) attributes {dimension_semantics = [#tpu.dimension_semantics<parallel>], iteration_bounds = array<i64: 1>, scalar_prefetch = 0 : i64, scratch_operands = 1 : i64, tpu.core_type = #tpu.core_type<tc>, window_params = [{transform_indices = @transform_0, window_bounds = array<i64: 16, 853>}, {transform_indices = @transform_1, window_bounds = array<i64: 8, 853>}, {pipeline_mode = #tpu.pipeline_mode<synchronous>, transform_indices = @transform_2, window_bounds = array<i64: 853, 256>}, {pipeline_mode = #tpu.pipeline_mode<synchronous>, transform_indices = @transform_3, window_bounds = array<i64: 1, 32>}, {pipeline_mode = #tpu.pipeline_mode<synchronous>, transform_indices = @transform_4, window_bounds = array<i64: 16, 10>}, {pipeline_mode = #tpu.pipeline_mode<synchronous>, transform_indices = @transform_5, window_bounds = array<i64: 1, 10>}, {pipeline_mode = #tpu.pipeline_mode<synchronous>, transform_indices = @transform_6, window_bounds = array<i64: 1, 10>}, {pipeline_mode = #tpu.pipeline_mode<synchronous>, transform_indices = @transform_7, window_bounds = array<i64: 1, 1>}, {transform_indices = @transform_8, window_bounds = array<i64: 16, 1>}]} {
    %c0 = arith.constant 0 : index
    %c0_0 = arith.constant 0 : index
    %0 = vector.load %arg3[%c0, %c0_0] : memref<853x256xbf16, #tpu.memory_space<vmem>>, vector<853x256xbf16>
    %c0_1 = arith.constant 0 : index
    %c0_2 = arith.constant 0 : index
    %1 = vector.load %arg1[%c0_1, %c0_2] : memref<16x853xf32, #tpu.memory_space<vmem>>, vector<16x853xf32>
    %2 = arith.truncf %1 : vector<16x853xf32> to vector<16x853xbf16>
    %cst = arith.constant dense<0.000000e+00> : vector<16x256xf32>
    %3 = tpu.matmul %2, %0, %cst {dimension_numbers = #tpu.dot_dimension_numbers<[1], [0], [0], [1], [0, 0, 1, 1], [], []>} : vector<16x853xbf16>, vector<853x256xbf16>, vector<16x256xf32> -> vector<16x256xf32>
    %c0_3 = arith.constant 0 : index
    %c0_4 = arith.constant 0 : index
    %4 = vector.load %arg10[%c0_3, %c0_4] : memref<24x256xf32, #tpu.memory_space<vmem>>, vector<16x256xf32>
    tpu.vector_store %arg10[%c0_3, %c0_4], %3 {strides = array<i32>} : memref<24x256xf32, #tpu.memory_space<vmem>>, vector<16x256xf32>,
    %c0_5 = arith.constant 0 : index
    %c0_6 = arith.constant 0 : index
    %5 = vector.load %arg2[%c0_5, %c0_6] : memref<8x853xf32, #tpu.memory_space<vmem>>, vector<8x853xf32>
    %6 = arith.truncf %5 : vector<8x853xf32> to vector<8x853xbf16>
    %cst_7 = arith.constant dense<0.000000e+00> : vector<8x256xf32>
    %7 = tpu.matmul %6, %0, %cst_7 {dimension_numbers = #tpu.dot_dimension_numbers<[1], [0], [0], [1], [0, 0, 1, 1], [], []>} : vector<8x853xbf16>, vector<853x256xbf16>, vector<8x256xf32> -> vector<8x256xf32>
    %c16 = arith.constant 16 : index
    %c0_8 = arith.constant 0 : index
    %8 = vector.load %arg10[%c16, %c0_8] : memref<24x256xf32, #tpu.memory_space<vmem>>, vector<8x256xf32>
    tpu.vector_store %arg10[%c16, %c0_8], %7 {strides = array<i32>} : memref<24x256xf32, #tpu.memory_space<vmem>>, vector<8x256xf32>,
    %c0_9 = arith.constant 0 : index
    %c0_10 = arith.constant 0 : index
    %9 = vector.load %arg10[%c0_9, %c0_10] : memref<24x256xf32, #tpu.memory_space<vmem>>, vector<16x32xf32>
    %c1 = arith.constant 1 : index
    %c32 = arith.constant 32 : index
    %10 = vector.load %arg10[%c1, %c32] : memref<24x256xf32, #tpu.memory_space<vmem>>, vector<16x32xf32>
    %11 = arith.addf %9, %10 : vector<16x32xf32>
    %c2 = arith.constant 2 : index
    %c64 = arith.constant 64 : index
    %12 = vector.load %arg10[%c2, %c64] : memref<24x256xf32, #tpu.memory_space<vmem>>, vector<16x32xf32>
    %13 = arith.addf %11, %12 : vector<16x32xf32>
    %c3 = arith.constant 3 : index
    %c96 = arith.constant 96 : index
    %14 = vector.load %arg10[%c3, %c96] : memref<24x256xf32, #tpu.memory_space<vmem>>, vector<16x32xf32>
    %15 = arith.addf %13, %14 : vector<16x32xf32>
    %c4 = arith.constant 4 : index
    %c128 = arith.constant 128 : index
    %16 = vector.load %arg10[%c4, %c128] : memref<24x256xf32, #tpu.memory_space<vmem>>, vector<16x32xf32>
    %17 = arith.addf %15, %16 : vector<16x32xf32>
    %c5 = arith.constant 5 : index
    %c160 = arith.constant 160 : index
    %18 = vector.load %arg10[%c5, %c160] : memref<24x256xf32, #tpu.memory_space<vmem>>, vector<16x32xf32>
    %19 = arith.addf %17, %18 : vector<16x32xf32>
    %c6 = arith.constant 6 : index
    %c192 = arith.constant 192 : index
    %20 = vector.load %arg10[%c6, %c192] : memref<24x256xf32, #tpu.memory_space<vmem>>, vector<16x32xf32>
    %21 = arith.addf %19, %20 : vector<16x32xf32>
    %c7 = arith.constant 7 : index
    %c224 = arith.constant 224 : index
    %22 = vector.load %arg10[%c7, %c224] : memref<24x256xf32, #tpu.memory_space<vmem>>, vector<16x32xf32>
    %23 = arith.addf %21, %22 : vector<16x32xf32>
    %c0_11 = arith.constant 0 : index
    %c0_12 = arith.constant 0 : index
    %24 = vector.load %arg4[%c0_11, %c0_12] : memref<1x32xf32, #tpu.memory_space<vmem>>, vector<1x32xf32>
    %25 = vector.broadcast %24 : vector<1x32xf32> to vector<16x32xf32>
    %26 = arith.addf %23, %25 : vector<16x32xf32>
    %cst_13 = arith.constant 0.000000e+00 : f32
    %27 = vector.broadcast %cst_13 : f32 to vector<16x32xf32>
    %28 = arith.maximumf %26, %27 : vector<16x32xf32>
    %29 = vector.extract_strided_slice %28 {offsets = [0, 0], sizes = [16, 16], strides = [1, 1]} : vector<16x32xf32> to vector<16x16xf32>
    %30 = vector.extract_strided_slice %28 {offsets = [0, 16], sizes = [16, 16], strides = [1, 1]} : vector<16x32xf32> to vector<16x16xf32>
    %31 = arith.maximumf %29, %30 : vector<16x16xf32>
    %c0_14 = arith.constant 0 : index
    %c0_15 = arith.constant 0 : index
    %32 = vector.load %arg5[%c0_14, %c0_15] : memref<16x10xf32, #tpu.memory_space<vmem>>, vector<16x10xf32>
    %cst_16 = arith.constant dense<0.000000e+00> : vector<16x10xf32>
    %33 = tpu.matmul %31, %32, %cst_16 {dimension_numbers = #tpu.dot_dimension_numbers<[1], [0], [0], [1], [0, 0, 1, 1], [], []>} : vector<16x16xf32>, vector<16x10xf32>, vector<16x10xf32> -> vector<16x10xf32>
    %c0_17 = arith.constant 0 : index
    %c0_18 = arith.constant 0 : index
    %34 = vector.load %arg6[%c0_17, %c0_18] : memref<1x10xf32, #tpu.memory_space<vmem>>, vector<1x10xf32>
    %35 = vector.broadcast %34 : vector<1x10xf32> to vector<16x10xf32>
    %36 = arith.addf %33, %35 : vector<16x10xf32>
    %cst_19 = arith.constant 0.000000e+00 : f32
    %37 = vector.broadcast %cst_19 : f32 to vector<16x10xf32>
    %38 = arith.maximumf %36, %37 : vector<16x10xf32>
    %c0_20 = arith.constant 0 : index
    %c0_21 = arith.constant 0 : index
    %39 = vector.load %arg7[%c0_20, %c0_21] : memref<1x10xf32, #tpu.memory_space<vmem>>, vector<1x10xf32>
    %40 = vector.broadcast %39 : vector<1x10xf32> to vector<16x10xf32>
    %41 = arith.mulf %38, %40 : vector<16x10xf32>
    %cst_22 = arith.constant dense<0.000000e+00> : vector<16xf32>
    %42 = vector.multi_reduction <add>, %41, %cst_22 [1] : vector<16x10xf32> to vector<16xf32>
    %43 = vector.shape_cast %42 : vector<16xf32> to vector<16x1xf32>
    %c0_23 = arith.constant 0 : index
    %c0_24 = arith.constant 0 : index
    %44 = vector.load %arg8[%c0_23, %c0_24] : memref<1x1xf32, #tpu.memory_space<vmem>>, vector<1x1xf32>
    %45 = vector.broadcast %44 : vector<1x1xf32> to vector<16x1xf32>
    %46 = arith.addf %43, %45 : vector<16x1xf32>
    %47 = arith.negf %46 : vector<16x1xf32>
    %48 = math.exp %47 : vector<16x1xf32>
    %cst_25 = arith.constant 1.000000e+00 : f32
    %49 = vector.broadcast %cst_25 : f32 to vector<16x1xf32>
    %50 = arith.addf %49, %48 : vector<16x1xf32>
    %51 = arith.divf %49, %50 : vector<16x1xf32>
    %c0_26 = arith.constant 0 : index
    %c0_27 = arith.constant 0 : index
    %52 = vector.load %arg9[%c0_26, %c0_27] : memref<16x1xf32, #tpu.memory_space<vmem>>, vector<16x1xf32>
    tpu.vector_store %arg9[%c0_26, %c0_27], %51 {strides = array<i32>} : memref<16x1xf32, #tpu.memory_space<vmem>>, vector<16x1xf32>,
    return
  }
  func.func @transform_0(%arg0: i32) -> (i32, i32) {
    %c0_i32 = arith.constant 0 : i32
    %c0_i32_0 = arith.constant 0 : i32
    return %arg0, %c0_i32 : i32, i32
  }
  func.func @transform_1(%arg0: i32) -> (i32, i32) {
    %c1_i32 = arith.constant 1 : i32
    %0 = arith.addi %arg0, %c1_i32 : i32
    %c2_i32 = arith.constant 2 : i32
    %1 = arith.muli %0, %c2_i32 : i32
    %c1_i32_0 = arith.constant 1 : i32
    %2 = arith.minsi %1, %c1_i32_0 : i32
    %c0_i32 = arith.constant 0 : i32
    %c0_i32_1 = arith.constant 0 : i32
    return %2, %c0_i32 : i32, i32
  }
  func.func @transform_2(%arg0: i32) -> (i32, i32) {
    %c0_i32 = arith.constant 0 : i32
    %c0_i32_0 = arith.constant 0 : i32
    %c0_i32_1 = arith.constant 0 : i32
    return %c0_i32, %c0_i32_0 : i32, i32
  }
  func.func @transform_3(%arg0: i32) -> (i32, i32) {
    %c0_i32 = arith.constant 0 : i32
    %c0_i32_0 = arith.constant 0 : i32
    %c0_i32_1 = arith.constant 0 : i32
    return %c0_i32, %c0_i32_0 : i32, i32
  }
  func.func @transform_4(%arg0: i32) -> (i32, i32) {
    %c0_i32 = arith.constant 0 : i32
    %c0_i32_0 = arith.constant 0 : i32
    %c0_i32_1 = arith.constant 0 : i32
    return %c0_i32, %c0_i32_0 : i32, i32
  }
  func.func @transform_5(%arg0: i32) -> (i32, i32) {
    %c0_i32 = arith.constant 0 : i32
    %c0_i32_0 = arith.constant 0 : i32
    %c0_i32_1 = arith.constant 0 : i32
    return %c0_i32, %c0_i32_0 : i32, i32
  }
  func.func @transform_6(%arg0: i32) -> (i32, i32) {
    %c0_i32 = arith.constant 0 : i32
    %c0_i32_0 = arith.constant 0 : i32
    %c0_i32_1 = arith.constant 0 : i32
    return %c0_i32, %c0_i32_0 : i32, i32
  }
  func.func @transform_7(%arg0: i32) -> (i32, i32) {
    %c0_i32 = arith.constant 0 : i32
    %c0_i32_0 = arith.constant 0 : i32
    %c0_i32_1 = arith.constant 0 : i32
    return %c0_i32, %c0_i32_0 : i32, i32
  }
  func.func @transform_8(%arg0: i32) -> (i32, i32) {
    %c0_i32 = arith.constant 0 : i32
    %c0_i32_0 = arith.constant 0 : i32
    return %arg0, %c0_i32 : i32, i32
  }
}

</mosaic_0001>

<llo_original>
// kernel: net_forward.1
$region0: #{net_forward.1}
  #allocation0 [shape = 'u32[]', space=smem, size = 0x4, offset = 0x4, fixed_abs, tag = 'smem constant byte address 0x4 - core index']
  #allocation1 [shape = 'u32[144,128]{1,0:T(1,128)}', space=vmem, size = 0x12000, scoped, tag = 'internal scratch']
  #allocation2 [shape = 'f32[24,256]{1,0:T(8,128)}', space=vmem, size = 0x6000, scoped, tag = 'scratch operand']
  #allocation3 [shape = 'f32[1,1]{1,0:T(1,128)S(1)}', space=vmem, size = 0x200, scoped, tag = 'scoped memory for net_forward.1']
  %s0 = inlined_call_operand.vmem [shape: f32[16,853], index: 0, kind: input, shape index: {}, may-alias: {0,1}]
  %s1 = inlined_call_operand.vmem [shape: f32[16,853], index: 1, kind: input, shape index: {}, may-alias: {0,1}]
  %s2 = inlined_call_operand.vmem [shape: bf16[853,256], index: 2, kind: input, shape index: {}]
  %s3 = inlined_call_operand.vmem [shape: f32[1,32], index: 3, kind: input, shape index: {}]
  %s4 = inlined_call_operand.vmem [shape: f32[16,10], index: 4, kind: input, shape index: {}]
  %s5 = inlined_call_operand.vmem [shape: f32[1,10], index: 5, kind: input, shape index: {}]
  %s6 = inlined_call_operand.vmem [shape: f32[1,10], index: 6, kind: input, shape index: {}]
  %s7 = inlined_call_operand.<no memory space> [shape: f32[1,1], index: 7, kind: input, shape index: {}]
  %s8 = inlined_call_operand.vmem [shape: f32[16,1], index: 8, kind: output, shape index: {}]
  %s9 = sld [smem:[#allocation0]]
  $region42: #{net_forward.1} parent=0
    _
  %s11 = ssub.s32 1, %s9
  %s12 = scalar_select 0, %s11, %s9
  %v13 = vstv %s7
  %14 = vst [vmem:[#allocation3] sm:$0x1] %v13
  // Predicated region
  $region2: #{net_forward.1} parent=0 // pred_check
    _
  $region3: #{net_forward.1} parent=0 // pred_check_branch
    %16 = sbr.rel (0) target = $region5
  $region4: #{net_forward.1} parent=0 // pred_region
    _
  $region5: #{net_forward.1} parent=0 // pred_fallthru
    _
  // Predicated region
  $region6: #{net_forward.1} parent=0 // pred_check
    _
  $region7: #{net_forward.1} parent=0 // pred_check_branch
    %18 = sbr.rel (0) target = $region9
  $region8: #{net_forward.1} parent=0 // pred_region
    %s19 = sadd.s32 0, 1
    %s20 = smul.u32 %s19, 2
    %p21 = scmp.lt.s32.totalorder %s20, 1
    %s22 = scalar_select %p21, %s20, 1
    %p23 = scmp.lt.s32.totalorder %s22, 1
    %s24 = scalar_select %p23, %s22, 1
    %s25 = smul.addr %s24, 7
    %s26 = smul.addr %s25, 8
    %s27 = scalar_lea.vmem %s1, %s26
    %s28 = sadd.s32 0, 1
    %s29 = smul.u32 %s28, 2
    %p30 = scmp.lt.s32.totalorder %s29, 1
    %s31 = scalar_select %p30, %s29, 1
  $region9: #{net_forward.1} parent=0 // pred_fallthru
    _
  // Predicated region
  $region10: #{net_forward.1} parent=0 // pred_check
    _
  $region11: #{net_forward.1} parent=0 // pred_check_branch
    %33 = sbr.rel (0) target = $region13
  $region12: #{net_forward.1} parent=0 // pred_region
    _
  $region13: #{net_forward.1} parent=0 // pred_fallthru
    _
  // Predicated region
  $region14: #{net_forward.1} parent=0 // pred_check
    _
  $region15: #{net_forward.1} parent=0 // pred_check_branch
    %35 = sbr.rel (0) target = $region17
  $region16: #{net_forward.1} parent=0 // pred_region
    _
  $region17: #{net_forward.1} parent=0 // pred_fallthru
    _
  // Predicated region
  $region18: #{net_forward.1} parent=0 // pred_check
    _
  $region19: #{net_forward.1} parent=0 // pred_check_branch
    %37 = sbr.rel (0) target = $region21
  $region20: #{net_forward.1} parent=0 // pred_region
    _
  $region21: #{net_forward.1} parent=0 // pred_fallthru
    _
  // Predicated region
  $region22: #{net_forward.1} parent=0 // pred_check
    _
  $region23: #{net_forward.1} parent=0 // pred_check_branch
    %39 = sbr.rel (0) target = $region25
  $region24: #{net_forward.1} parent=0 // pred_region
    _
  $region25: #{net_forward.1} parent=0 // pred_fallthru
    _
  // Predicated region
  $region26: #{net_forward.1} parent=0 // pred_check
    _
  $region27: #{net_forward.1} parent=0 // pred_check_branch
    %41 = sbr.rel (0) target = $region29
  $region28: #{net_forward.1} parent=0 // pred_region
    _
  $region29: #{net_forward.1} parent=0 // pred_fallthru
    _
  // Predicated region
  $region30: #{net_forward.1} parent=0 // pred_check
    _
  $region31: #{net_forward.1} parent=0 // pred_check_branch
    %43 = sbr.rel (0) target = $region33
  $region32: #{net_forward.1} parent=0 // pred_region
    _
  $region33: #{net_forward.1} parent=0 // pred_fallthru
    _
  %s44 = sadd.s32 0, 1
  %s45 = smul.u32 %s44, 2
  %p46 = scmp.lt.s32.totalorder %s45, 1
  %s47 = scalar_select %p46, %s45, 1
  %p48 = scmp.lt.s32.totalorder %s47, 1
  %s49 = scalar_select %p48, %s47, 1
  %s50 = smul.addr %s49, 7
  %s51 = smul.addr %s50, 8
  %s52 = scalar_lea.vmem %s1, %s51
  %s53 = sadd.s32 0, 1
  %s54 = smul.u32 %s53, 2
  %p55 = scmp.lt.s32.totalorder %s54, 1
  %s56 = scalar_select %p55, %s54, 1
  %p57 = scmp.lt.s32.totalorder %s56, 1
  %s58 = scalar_select %p57, %s56, 1
  %s59 = smul.addr %s58, 7
  %s60 = smul.addr %s59, 8
  %s61 = scalar_lea.vmem %s1, %s60
  %s62 = sadd.s32 0, 1
  %s63 = smul.u32 %s62, 2
  %p64 = scmp.lt.s32.totalorder %s63, 1
  %s65 = scalar_select %p64, %s63, 1
  %v67 = vld [vmem:[%s2] sm:$0xff]
  %v68 = vld [vmem:[%s2 + $0x8] sm:$0xff]
  %v69 = vld [vmem:[%s2 + $0x10] sm:$0xff]
  %v70 = vld [vmem:[%s2 + $0x18] sm:$0xff]
  %v71 = vld [vmem:[%s2 + $0x20] sm:$0xff]
  %v72 = vld [vmem:[%s2 + $0x28] sm:$0xff]
  %v73 = vld [vmem:[%s2 + $0x30] sm:$0xff]
  %v74 = vld [vmem:[%s2 + $0x38] sm:$0xff]
  %v75 = vld [vmem:[%s2 + $0x40] sm:$0xff]
  %v76 = vld [vmem:[%s2 + $0x48] sm:$0xff]
  %v77 = vld [vmem:[%s2 + $0x50] sm:$0xff]
  %v78 = vld [vmem:[%s2 + $0x58] sm:$0xff]
  %v79 = vld [vmem:[%s2 + $0x60] sm:$0xff]
  %v80 = vld [vmem:[%s2 + $0x68] sm:$0xff]
  %v81 = vld [vmem:[%s2 + $0x70] sm:$0xff]
  %v82 = vld [vmem:[%s2 + $0x78] sm:$0xff]
  %v83 = vld [vmem:[%s2 + $0x80] sm:$0xff]
  %v84 = vld [vmem:[%s2 + $0x88] sm:$0xff]
  %v85 = vld [vmem:[%s2 + $0x90] sm:$0xff]
  %v86 = vld [vmem:[%s2 + $0x98] sm:$0xff]
  %v87 = vld [vmem:[%s2 + $0xa0] sm:$0xff]
  %v88 = vld [vmem:[%s2 + $0xa8] sm:$0xff]
  %v89 = vld [vmem:[%s2 + $0xb0] sm:$0xff]
  %v90 = vld [vmem:[%s2 + $0xb8] sm:$0xff]
  %v91 = vld [vmem:[%s2 + $0xc0] sm:$0xff]
  %v92 = vld [vmem:[%s2 + $0xc8] sm:$0xff]
  %v93 = vld [vmem:[%s2 + $0xd0] sm:$0xff]
  %v94 = vld [vmem:[%s2 + $0xd8] sm:$0xff]
  %v95 = vld [vmem:[%s2 + $0xe0] sm:$0xff]
  %v96 = vld [vmem:[%s2 + $0xe8] sm:$0xff]
  %v97 = vld [vmem:[%s2 + $0xf0] sm:$0xff]
  %v98 = vld [vmem:[%s2 + $0xf8] sm:$0xff]
  %v99 = vld [vmem:[%s2 + $0x100] sm:$0xff]
  %v100 = vld [vmem:[%s2 + $0x108] sm:$0xff]
  %v101 = vld [vmem:[%s2 + $0x110] sm:$0xff]
  %v102 = vld [vmem:[%s2 + $0x118] sm:$0xff]
  %v103 = vld [vmem:[%s2 + $0x120] sm:$0xff]
  %v104 = vld [vmem:[%s2 + $0x128] sm:$0xff]
  %v105 = vld [vmem:[%s2 + $0x130] sm:$0xff]
  %v106 = vld [vmem:[%s2 + $0x138] sm:$0xff]
  %v107 = vld [vmem:[%s2 + $0x140] sm:$0xff]
  %v108 = vld [vmem:[%s2 + $0x148] sm:$0xff]
  %v109 = vld [vmem:[%s2 + $0x150] sm:$0xff]
  %v110 = vld [vmem:[%s2 + $0x158] sm:$0xff]
  %v111 = vld [vmem:[%s2 + $0x160] sm:$0xff]
  %v112 = vld [vmem:[%s2 + $0x168] sm:$0xff]
  %v113 = vld [vmem:[%s2 + $0x170] sm:$0xff]
  %v114 = vld [vmem:[%s2 + $0x178] sm:$0xff]
  %v115 = vld [vmem:[%s2 + $0x180] sm:$0xff]
  %v116 = vld [vmem:[%s2 + $0x188] sm:$0xff]
  %v117 = vld [vmem:[%s2 + $0x190] sm:$0xff]
  %v118 = vld [vmem:[%s2 + $0x198] sm:$0xff]
  %v119 = vld [vmem:[%s2 + $0x1a0] sm:$0xff]
  %v120 = vld [vmem:[%s2 + $0x1a8] sm:$0xff]
  %v121 = vld [vmem:[%s2 + $0x1b0] sm:$0xff]
  %v122 = vld [vmem:[%s2 + $0x1b8] sm:$0xff]
  %v123 = vld [vmem:[%s2 + $0x1c0] sm:$0xff]
  %v124 = vld [vmem:[%s2 + $0x1c8] sm:$0xff]
  %v125 = vld [vmem:[%s2 + $0x1d0] sm:$0xff]
  %v126 = vld [vmem:[%s2 + $0x1d8] sm:$0xff]
  %v127 = vld [vmem:[%s2 + $0x1e0] sm:$0xff]
  %v128 = vld [vmem:[%s2 + $0x1e8] sm:$0xff]
  %v129 = vld [vmem:[%s2 + $0x1f0] sm:$0xff]
  %v130 = vld [vmem:[%s2 + $0x1f8] sm:$0xff]
  %v131 = vld [vmem:[%s2 + $0x200] sm:$0xff]
  %v132 = vld [vmem:[%s2 + $0x208] sm:$0xff]
  %v133 = vld [vmem:[%s2 + $0x210] sm:$0xff]
  %v134 = vld [vmem:[%s2 + $0x218] sm:$0xff]
  %v135 = vld [vmem:[%s2 + $0x220] sm:$0xff]
  %v136 = vld [vmem:[%s2 + $0x228] sm:$0xff]
  %v137 = vld [vmem:[%s2 + $0x230] sm:$0xff]
  %v138 = vld [vmem:[%s2 + $0x238] sm:$0xff]
  %v139 = vld [vmem:[%s2 + $0x240] sm:$0xff]
  %v140 = vld [vmem:[%s2 + $0x248] sm:$0xff]
  %v141 = vld [vmem:[%s2 + $0x250] sm:$0xff]
  %v142 = vld [vmem:[%s2 + $0x258] sm:$0xff]
  %v143 = vld [vmem:[%s2 + $0x260] sm:$0xff]
  %v144 = vld [vmem:[%s2 + $0x268] sm:$0xff]
  %v145 = vld [vmem:[%s2 + $0x270] sm:$0xff]
  %v146 = vld [vmem:[%s2 + $0x278] sm:$0xff]
  %v147 = vld [vmem:[%s2 + $0x280] sm:$0xff]
  %v148 = vld [vmem:[%s2 + $0x288] sm:$0xff]
  %v149 = vld [vmem:[%s2 + $0x290] sm:$0xff]
  %v150 = vld [vmem:[%s2 + $0x298] sm:$0xff]
  %v151 = vld [vmem:[%s2 + $0x2a0] sm:$0xff]
  %v152 = vld [vmem:[%s2 + $0x2a8] sm:$0xff]
  %v153 = vld [vmem:[%s2 + $0x2b0] sm:$0xff]
  %v154 = vld [vmem:[%s2 + $0x2b8] sm:$0xff]
  %v155 = vld [vmem:[%s2 + $0x2c0] sm:$0xff]
  %v156 = vld [vmem:[%s2 + $0x2c8] sm:$0xff]
  %v157 = vld [vmem:[%s2 + $0x2d0] sm:$0xff]
  %v158 = vld [vmem:[%s2 + $0x2d8] sm:$0xff]
  %v159 = vld [vmem:[%s2 + $0x2e0] sm:$0xff]
  %v160 = vld [vmem:[%s2 + $0x2e8] sm:$0xff]
  %v161 = vld [vmem:[%s2 + $0x2f0] sm:$0xff]
  %v162 = vld [vmem:[%s2 + $0x2f8] sm:$0xff]
  %v163 = vld [vmem:[%s2 + $0x300] sm:$0xff]
  %v164 = vld [vmem:[%s2 + $0x308] sm:$0xff]
  %v165 = vld [vmem:[%s2 + $0x310] sm:$0xff]
  %v166 = vld [vmem:[%s2 + $0x318] sm:$0xff]
  %v167 = vld [vmem:[%s2 + $0x320] sm:$0xff]
  %v168 = vld [vmem:[%s2 + $0x328] sm:$0xff]
  %v169 = vld [vmem:[%s2 + $0x330] sm:$0xff]
  %v170 = vld [vmem:[%s2 + $0x338] sm:$0xff]
  %v171 = vld [vmem:[%s2 + $0x340] sm:$0xff]
  %v172 = vld [vmem:[%s2 + $0x348] sm:$0xff]
  %v173 = vld [vmem:[%s2 + $0x350] sm:$0x77]
  %v174 = vld [vmem:[%s0] sm:$0xff]
  %v175 = vld [vmem:[%s0 + $0x8] sm:$0xff]
  %v176 = vld [vmem:[%s0 + $0x10] sm:$0xff]
  %v177 = vld [vmem:[%s0 + $0x18] sm:$0xff]
  %v178 = vld [vmem:[%s0 + $0x20] sm:$0xff]
  %v179 = vld [vmem:[%s0 + $0x28] sm:$0xff]
  %v180 = vld [vmem:[%s0 + $0x30] sm:$0xff]
  %v181 = vld [vmem:[%s0 + $0x38] sm:$0xff]
  %v182 = vld [vmem:[%s0 + $0x40] sm:$0xff]
  %v183 = vld [vmem:[%s0 + $0x48] sm:$0xff]
  %v184 = vld [vmem:[%s0 + $0x50] sm:$0xff]
  %v185 = vld [vmem:[%s0 + $0x58] sm:$0xff]
  %v186 = vld [vmem:[%s0 + $0x60] sm:$0xff]
  %v187 = vld [vmem:[%s0 + $0x68] sm:$0xff]
  %v188 = vpack.c.bf16 %v181, %v174
  %v189 = vpack.c.bf16 %v182, %v175
  %v190 = vpack.c.bf16 %v183, %v176
  %v191 = vpack.c.bf16 %v184, %v177
  %v192 = vpack.c.bf16 %v185, %v178
  %v193 = vpack.c.bf16 %v186, %v179
  %v194 = vpack.c.bf16 %v187, %v180
  %v302 = vunpack.c.l.b16 %v67
  %v303 = vunpack.c.h.b16 %v67
  %v304 = vunpack.c.l.b16 %v68
  %v305 = vunpack.c.h.b16 %v68
  %v306 = vunpack.c.l.b16 %v69
  %v307 = vunpack.c.h.b16 %v69
  %v308 = vunpack.c.l.b16 %v70
  %v309 = vunpack.c.h.b16 %v70
  %v310 = vunpack.c.l.b16 %v71
  %v311 = vunpack.c.h.b16 %v71
  %v312 = vunpack.c.l.b16 %v72
  %v313 = vunpack.c.h.b16 %v72
  %v314 = vunpack.c.l.b16 %v73
  %v315 = vunpack.c.h.b16 %v73
  %v316 = vunpack.c.l.b16 %v74
  %v317 = vunpack.c.h.b16 %v74
  %v318 = vunpack.c.l.b16 %v75
  %v319 = vunpack.c.h.b16 %v75
  %v320 = vunpack.c.l.b16 %v76
  %v321 = vunpack.c.h.b16 %v76
  %v322 = vunpack.c.l.b16 %v77
  %v323 = vunpack.c.h.b16 %v77
  %v324 = vunpack.c.l.b16 %v78
  %v325 = vunpack.c.h.b16 %v78
  %v326 = vunpack.c.l.b16 %v79
  %v327 = vunpack.c.h.b16 %v79
  %v328 = vunpack.c.l.b16 %v80
  %v329 = vunpack.c.h.b16 %v80
  %v330 = vunpack.c.l.b16 %v81
  %v331 = vunpack.c.h.b16 %v81
  %v332 = vunpack.c.l.b16 %v82
  %v333 = vunpack.c.h.b16 %v82
  %v334 = vunpack.c.l.b16 %v83
  %v335 = vunpack.c.h.b16 %v83
  %v336 = vunpack.c.l.b16 %v84
  %v337 = vunpack.c.h.b16 %v84
  %v338 = vunpack.c.l.b16 %v85
  %v339 = vunpack.c.h.b16 %v85
  %v340 = vunpack.c.l.b16 %v86
  %v341 = vunpack.c.h.b16 %v86
  %v342 = vunpack.c.l.b16 %v87
  %v343 = vunpack.c.h.b16 %v87
  %v344 = vunpack.c.l.b16 %v88
  %v345 = vunpack.c.h.b16 %v88
  %v346 = vunpack.c.l.b16 %v89
  %v347 = vunpack.c.h.b16 %v89
  %v348 = vunpack.c.l.b16 %v90
  %v349 = vunpack.c.h.b16 %v90
  %v350 = vunpack.c.l.b16 %v91
  %v351 = vunpack.c.h.b16 %v91
  %v352 = vunpack.c.l.b16 %v92
  %v353 = vunpack.c.h.b16 %v92
  %v354 = vunpack.c.l.b16 %v93
  %v355 = vunpack.c.h.b16 %v93
  %v356 = vunpack.c.l.b16 %v94
  %v357 = vunpack.c.h.b16 %v94
  %v358 = vunpack.c.l.b16 %v95
  %v359 = vunpack.c.h.b16 %v95
  %v360 = vunpack.c.l.b16 %v96
  %v361 = vunpack.c.h.b16 %v96
  %v362 = vunpack.c.l.b16 %v97
  %v363 = vunpack.c.h.b16 %v97
  %v364 = vunpack.c.l.b16 %v98
  %v365 = vunpack.c.h.b16 %v98
  %v366 = vunpack.c.l.b16 %v99
  %v367 = vunpack.c.h.b16 %v99
  %v368 = vunpack.c.l.b16 %v100
  %v369 = vunpack.c.h.b16 %v100
  %v370 = vunpack.c.l.b16 %v101
  %v371 = vunpack.c.h.b16 %v101
  %v372 = vunpack.c.l.b16 %v102
  %v373 = vunpack.c.h.b16 %v102
  %v374 = vunpack.c.l.b16 %v103
  %v375 = vunpack.c.h.b16 %v103
  %v376 = vunpack.c.l.b16 %v104
  %v377 = vunpack.c.h.b16 %v104
  %v378 = vunpack.c.l.b16 %v105
  %v379 = vunpack.c.h.b16 %v105
  %v380 = vunpack.c.l.b16 %v106
  %v381 = vunpack.c.h.b16 %v106
  %v382 = vunpack.c.l.b16 %v107
  %v383 = vunpack.c.h.b16 %v107
  %v384 = vunpack.c.l.b16 %v108
  %v385 = vunpack.c.h.b16 %v108
  %v386 = vunpack.c.l.b16 %v109
  %v387 = vunpack.c.h.b16 %v109
  %v388 = vunpack.c.l.b16 %v110
  %v389 = vunpack.c.h.b16 %v110
  %v390 = vunpack.c.l.b16 %v111
  %v391 = vunpack.c.h.b16 %v111
  %v392 = vunpack.c.l.b16 %v112
  %v393 = vunpack.c.h.b16 %v112
  %v394 = vunpack.c.l.b16 %v113
  %v395 = vunpack.c.h.b16 %v113
  %v396 = vunpack.c.l.b16 %v114
  %v397 = vunpack.c.h.b16 %v114
  %v398 = vunpack.c.l.b16 %v115
  %v399 = vunpack.c.h.b16 %v115
  %v400 = vunpack.c.l.b16 %v116
  %v401 = vunpack.c.h.b16 %v116
  %v402 = vunpack.c.l.b16 %v117
  %v403 = vunpack.c.h.b16 %v117
  %v404 = vunpack.c.l.b16 %v118
  %v405 = vunpack.c.h.b16 %v118
  %v406 = vunpack.c.l.b16 %v119
  %v407 = vunpack.c.h.b16 %v119
  %v408 = vunpack.c.l.b16 %v120
  %v409 = vunpack.c.h.b16 %v120
  %v410 = vunpack.c.l.b16 %v121
  %v411 = vunpack.c.h.b16 %v121
  %v412 = vunpack.c.l.b16 %v122
  %v413 = vunpack.c.h.b16 %v122
  %v414 = vunpack.c.l.b16 %v123
  %v415 = vunpack.c.h.b16 %v123
  %v416 = vunpack.c.l.b16 %v124
  %v417 = vunpack.c.h.b16 %v124
  %v418 = vunpack.c.l.b16 %v125
  %v419 = vunpack.c.h.b16 %v125
  %v420 = vunpack.c.l.b16 %v126
  %v421 = vunpack.c.h.b16 %v126
  %v422 = vunpack.c.l.b16 %v127
  %v423 = vunpack.c.h.b16 %v127
  %v424 = vunpack.c.l.b16 %v128
  %v425 = vunpack.c.h.b16 %v128
  %v426 = vunpack.c.l.b16 %v129
  %v427 = vunpack.c.h.b16 %v129
  %v428 = vunpack.c.l.b16 %v130
  %v429 = vunpack.c.h.b16 %v130
  %v430 = vunpack.c.l.b16 %v131
  %v431 = vunpack.c.h.b16 %v131
  %v432 = vunpack.c.l.b16 %v132
  %v433 = vunpack.c.h.b16 %v132
  %v434 = vunpack.c.l.b16 %v133
  %v435 = vunpack.c.h.b16 %v133
  %v436 = vunpack.c.l.b16 %v134
  %v437 = vunpack.c.h.b16 %v134
  %v438 = vunpack.c.l.b16 %v135
  %v439 = vunpack.c.h.b16 %v135
  %v440 = vunpack.c.l.b16 %v136
  %v441 = vunpack.c.h.b16 %v136
  %v442 = vunpack.c.l.b16 %v137
  %v443 = vunpack.c.h.b16 %v137
  %v444 = vunpack.c.l.b16 %v138
  %v445 = vunpack.c.h.b16 %v138
  %v446 = vunpack.c.l.b16 %v139
  %v447 = vunpack.c.h.b16 %v139
  %v448 = vunpack.c.l.b16 %v140
  %v449 = vunpack.c.h.b16 %v140
  %v450 = vunpack.c.l.b16 %v141
  %v451 = vunpack.c.h.b16 %v141
  %v452 = vunpack.c.l.b16 %v142
  %v453 = vunpack.c.h.b16 %v142
  %v454 = vunpack.c.l.b16 %v143
  %v455 = vunpack.c.h.b16 %v143
  %v456 = vunpack.c.l.b16 %v144
  %v457 = vunpack.c.h.b16 %v144
  %v458 = vunpack.c.l.b16 %v145
  %v459 = vunpack.c.h.b16 %v145
  %v460 = vunpack.c.l.b16 %v146
  %v461 = vunpack.c.h.b16 %v146
  %v462 = vunpack.c.l.b16 %v147
  %v463 = vunpack.c.h.b16 %v147
  %v464 = vunpack.c.l.b16 %v148
  %v465 = vunpack.c.h.b16 %v148
  %v466 = vunpack.c.l.b16 %v149
  %v467 = vunpack.c.h.b16 %v149
  %v468 = vunpack.c.l.b16 %v150
  %v469 = vunpack.c.h.b16 %v150
  %v470 = vunpack.c.l.b16 %v151
  %v471 = vunpack.c.h.b16 %v151
  %v472 = vunpack.c.l.b16 %v152
  %v473 = vunpack.c.h.b16 %v152
  %v474 = vunpack.c.l.b16 %v153
  %v475 = vunpack.c.h.b16 %v153
  %v476 = vunpack.c.l.b16 %v154
  %v477 = vunpack.c.h.b16 %v154
  %v478 = vunpack.c.l.b16 %v155
  %v479 = vunpack.c.h.b16 %v155
  %v480 = vunpack.c.l.b16 %v156
  %v481 = vunpack.c.h.b16 %v156
  %v482 = vunpack.c.l.b16 %v157
  %v483 = vunpack.c.h.b16 %v157
  %v484 = vunpack.c.l.b16 %v158
  %v485 = vunpack.c.h.b16 %v158
  %v486 = vunpack.c.l.b16 %v159
  %v487 = vunpack.c.h.b16 %v159
  %v488 = vunpack.c.l.b16 %v160
  %v489 = vunpack.c.h.b16 %v160
  %v490 = vunpack.c.l.b16 %v161
  %v491 = vunpack.c.h.b16 %v161
  %v492 = vunpack.c.l.b16 %v162
  %v493 = vunpack.c.h.b16 %v162
  %v494 = vunpack.c.l.b16 %v163
  %v495 = vunpack.c.h.b16 %v163
  %v496 = vunpack.c.l.b16 %v164
  %v497 = vunpack.c.h.b16 %v164
  %v498 = vunpack.c.l.b16 %v165
  %v499 = vunpack.c.h.b16 %v165
  %v500 = vunpack.c.l.b16 %v166
  %v501 = vunpack.c.h.b16 %v166
  %v502 = vunpack.c.l.b16 %v167
  %v503 = vunpack.c.h.b16 %v167
  %v504 = vunpack.c.l.b16 %v168
  %v505 = vunpack.c.h.b16 %v168
  %v506 = vunpack.c.l.b16 %v169
  %v507 = vunpack.c.h.b16 %v169
  %v508 = vunpack.c.l.b16 %v170
  %v509 = vunpack.c.h.b16 %v170
  %v510 = vunpack.c.l.b16 %v171
  %v511 = vunpack.c.h.b16 %v171
  %v512 = vunpack.c.l.b16 %v172
  %v513 = vunpack.c.h.b16 %v172
  %v514 = vunpack.c.l.b16 %v173
  %v515 = vunpack.c.h.b16 %v173
  %v516 = vpack.c.b16 %v304, %v302
  %v517 = vpack.c.b16 %v305, %v303
  %v518 = vpack.c.b16 %v308, %v306
  %v519 = vpack.c.b16 %v309, %v307
  %v520 = vpack.c.b16 %v312, %v310
  %v521 = vpack.c.b16 %v313, %v311
  %v522 = vpack.c.b16 %v316, %v314
  %v523 = vpack.c.b16 %v317, %v315
  %v524 = vpack.c.b16 %v320, %v318
  %v525 = vpack.c.b16 %v321, %v319
  %v526 = vpack.c.b16 %v324, %v322
  %v527 = vpack.c.b16 %v325, %v323
  %v528 = vpack.c.b16 %v328, %v326
  %v529 = vpack.c.b16 %v329, %v327
  %v530 = vpack.c.b16 %v332, %v330
  %v531 = vpack.c.b16 %v333, %v331
  %v532 = vpack.c.b16 %v336, %v334
  %v533 = vpack.c.b16 %v337, %v335
  %v534 = vpack.c.b16 %v340, %v338
  %v535 = vpack.c.b16 %v341, %v339
  %v536 = vpack.c.b16 %v344, %v342
  %v537 = vpack.c.b16 %v345, %v343
  %v538 = vpack.c.b16 %v348, %v346
  %v539 = vpack.c.b16 %v349, %v347
  %v540 = vpack.c.b16 %v352, %v350
  %v541 = vpack.c.b16 %v353, %v351
  %v542 = vpack.c.b16 %v356, %v354
  %v543 = vpack.c.b16 %v357, %v355
  %v544 = vpack.c.b16 %v360, %v358
  %v545 = vpack.c.b16 %v361, %v359
  %v546 = vpack.c.b16 %v364, %v362
  %v547 = vpack.c.b16 %v365, %v363
  %v548 = vpack.c.b16 %v368, %v366
  %v549 = vpack.c.b16 %v369, %v367
  %v550 = vpack.c.b16 %v372, %v370
  %v551 = vpack.c.b16 %v373, %v371
  %v552 = vpack.c.b16 %v376, %v374
  %v553 = vpack.c.b16 %v377, %v375
  %v554 = vpack.c.b16 %v380, %v378
  %v555 = vpack.c.b16 %v381, %v379
  %v556 = vpack.c.b16 %v384, %v382
  %v557 = vpack.c.b16 %v385, %v383
  %v558 = vpack.c.b16 %v388, %v386
  %v559 = vpack.c.b16 %v389, %v387
  %v560 = vpack.c.b16 %v392, %v390
  %v561 = vpack.c.b16 %v393, %v391
  %v562 = vpack.c.b16 %v396, %v394
  %v563 = vpack.c.b16 %v397, %v395
  %v564 = vpack.c.b16 %v400, %v398
  %v565 = vpack.c.b16 %v401, %v399
  %v566 = vpack.c.b16 %v404, %v402
  %v567 = vpack.c.b16 %v405, %v403
  %v568 = vpack.c.b16 %v408, %v406
  %v569 = vpack.c.b16 %v409, %v407
  %v570 = vpack.c.b16 %v412, %v410
  %v571 = vpack.c.b16 %v413, %v411
  %v572 = vpack.c.b16 %v416, %v414
  %v573 = vpack.c.b16 %v417, %v415
  %v574 = vpack.c.b16 %v420, %v418
  %v575 = vpack.c.b16 %v421, %v419
  %v576 = vpack.c.b16 %v424, %v422
  %v577 = vpack.c.b16 %v425, %v423
  %v578 = vpack.c.b16 %v428, %v426
  %v579 = vpack.c.b16 %v429, %v427
  %v580 = vpack.c.b16 %v432, %v430
  %v581 = vpack.c.b16 %v433, %v431
  %v582 = vpack.c.b16 %v436, %v434
  %v583 = vpack.c.b16 %v437, %v435
  %v584 = vpack.c.b16 %v440, %v438
  %v585 = vpack.c.b16 %v441, %v439
  %v586 = vpack.c.b16 %v444, %v442
  %v587 = vpack.c.b16 %v445, %v443
  %v588 = vpack.c.b16 %v448, %v446
  %v589 = vpack.c.b16 %v449, %v447
  %v590 = vpack.c.b16 %v452, %v450
  %v591 = vpack.c.b16 %v453, %v451
  %v592 = vpack.c.b16 %v456, %v454
  %v593 = vpack.c.b16 %v457, %v455
  %v594 = vpack.c.b16 %v460, %v458
  %v595 = vpack.c.b16 %v461, %v459
  %v596 = vpack.c.b16 %v464, %v462
  %v597 = vpack.c.b16 %v465, %v463
  %v598 = vpack.c.b16 %v468, %v466
  %v599 = vpack.c.b16 %v469, %v467
  %v600 = vpack.c.b16 %v472, %v470
  %v601 = vpack.c.b16 %v473, %v471
  %v602 = vpack.c.b16 %v476, %v474
  %v603 = vpack.c.b16 %v477, %v475
  %v604 = vpack.c.b16 %v480, %v478
  %v605 = vpack.c.b16 %v481, %v479
  %v606 = vpack.c.b16 %v484, %v482
  %v607 = vpack.c.b16 %v485, %v483
  %v608 = vpack.c.b16 %v488, %v486
  %v609 = vpack.c.b16 %v489, %v487
  %v610 = vpack.c.b16 %v492, %v490
  %v611 = vpack.c.b16 %v493, %v491
  %v612 = vpack.c.b16 %v496, %v494
  %v613 = vpack.c.b16 %v497, %v495
  %v614 = vpack.c.b16 %v500, %v498
  %v615 = vpack.c.b16 %v501, %v499
  %v616 = vpack.c.b16 %v504, %v502
  %v617 = vpack.c.b16 %v505, %v503
  %v618 = vpack.c.b16 %v508, %v506
  %v619 = vpack.c.b16 %v509, %v507
  %v620 = vpack.c.b16 %v512, %v510
  %v621 = vpack.c.b16 %v513, %v511
  %v622 = vpack.c.b16 %v514, %v514
  %v623 = vpack.c.b16 %v515, %v515
  %vm730 = vcmask 695296
  %v732 = vsel %vm730, %v194, 0
  %vm734 = vcmask 1041408
  %vm735 = vcmask 1042432
  %v736 = vsel %vm734, 4294967295, 65535
  %v737 = vsel %vm735, %v736, 0
  %v739 = vand.u32 %v622, %v737
  %v742 = vand.u32 %v623, %v737
  %744 = vmatprep.subr.bf16.mxu0 %v531
  %745 = vmatpush1.bf16.msra.mxu0 %v530
  %746 = vmatprep.subr.bf16.mxu0 %v529
  %747 = vmatpush1.bf16.msra.mxu0 %v528
  %748 = vmatprep.subr.bf16.mxu0 %v527
  %749 = vmatpush1.bf16.msra.mxu0 %v526
  %750 = vmatprep.subr.bf16.mxu0 %v525
  %751 = vmatpush1.bf16.msra.mxu0 %v524
  %752 = vmatprep.subr.bf16.mxu0 %v523
  %753 = vmatpush1.bf16.msra.mxu0 %v522
  %754 = vmatprep.subr.bf16.mxu0 %v521
  %755 = vmatpush1.bf16.msra.mxu0 %v520
  %756 = vmatprep.subr.bf16.mxu0 %v519
  %757 = vmatpush1.bf16.msra.mxu0 %v518
  %758 = vmatprep.subr.bf16.mxu0 %v517
  %759 = vmatpush1.bf16.msra.mxu0 %v516
  %760 = vmatprep.subr.bf16.mxu0 %v547
  %761 = vmatpush2.bf16.msra.mxu0 %v546
  %762 = vmatprep.subr.bf16.mxu0 %v545
  %763 = vmatpush2.bf16.msra.mxu0 %v544
  %764 = vmatprep.subr.bf16.mxu0 %v543
  %765 = vmatpush2.bf16.msra.mxu0 %v542
  %766 = vmatprep.subr.bf16.mxu0 %v541
  %767 = vmatpush2.bf16.msra.mxu0 %v540
  %768 = vmatprep.subr.bf16.mxu0 %v539
  %769 = vmatpush2.bf16.msra.mxu0 %v538
  %770 = vmatprep.subr.bf16.mxu0 %v537
  %771 = vmatpush2.bf16.msra.mxu0 %v536
  %772 = vmatprep.subr.bf16.mxu0 %v535
  %773 = vmatpush2.bf16.msra.mxu0 %v534
  %774 = vmatprep.subr.bf16.mxu0 %v533
  %775 = vmatpush2.bf16.msra.mxu0 %v532
  %776 = vmatprep.mubr.bf16.mxu0 %v189
  %777 = vmatmul.mubr.bf16.gmra.mxu0 %v188
  %v778 = vpop.f32.mrf.mxu0
  %v779 = vadd.f32 0.0, %v778
  %v780 = vpop.f32.mrf.mxu0
  %v781 = vadd.f32 0.0, %v780
  %v782 = vpop.f32.mrf.mxu0
  %v783 = vadd.f32 0.0, %v782
  %v784 = vpop.f32.mrf.mxu0
  %v785 = vadd.f32 0.0, %v784
  %786 = vdwg.mxu0
  %787 = vmatprep.subr.bf16.mxu0 %v563
  %788 = vmatpush1.bf16.msra.mxu0 %v562
  %789 = vmatprep.subr.bf16.mxu0 %v561
  %790 = vmatpush1.bf16.msra.mxu0 %v560
  %791 = vmatprep.subr.bf16.mxu0 %v559
  %792 = vmatpush1.bf16.msra.mxu0 %v558
  %793 = vmatprep.subr.bf16.mxu0 %v557
  %794 = vmatpush1.bf16.msra.mxu0 %v556
  %795 = vmatprep.subr.bf16.mxu0 %v555
  %796 = vmatpush1.bf16.msra.mxu0 %v554
  %797 = vmatprep.subr.bf16.mxu0 %v553
  %798 = vmatpush1.bf16.msra.mxu0 %v552
  %799 = vmatprep.subr.bf16.mxu0 %v551
  %800 = vmatpush1.bf16.msra.mxu0 %v550
  %801 = vmatprep.subr.bf16.mxu0 %v549
  %802 = vmatpush1.bf16.msra.mxu0 %v548
  %803 = vmatprep.subr.bf16.mxu0 %v579
  %804 = vmatpush2.bf16.msra.mxu0 %v578
  %805 = vmatprep.subr.bf16.mxu0 %v577
  %806 = vmatpush2.bf16.msra.mxu0 %v576
  %807 = vmatprep.subr.bf16.mxu0 %v575
  %808 = vmatpush2.bf16.msra.mxu0 %v574
  %809 = vmatprep.subr.bf16.mxu0 %v573
  %810 = vmatpush2.bf16.msra.mxu0 %v572
  %811 = vmatprep.subr.bf16.mxu0 %v571
  %812 = vmatpush2.bf16.msra.mxu0 %v570
  %813 = vmatprep.subr.bf16.mxu0 %v569
  %814 = vmatpush2.bf16.msra.mxu0 %v568
  %815 = vmatprep.subr.bf16.mxu0 %v567
  %816 = vmatpush2.bf16.msra.mxu0 %v566
  %817 = vmatprep.subr.bf16.mxu0 %v565
  %818 = vmatpush2.bf16.msra.mxu0 %v564
  %819 = vmatprep.mubr.bf16.mxu0 %v191
  %820 = vmatmul.mubr.bf16.gmra.mxu0 %v190
  %v821 = vpop.f32.mrf.mxu0
  %v822 = vadd.f32 %v779, %v821
  %v823 = vpop.f32.mrf.mxu0
  %v824 = vadd.f32 %v781, %v823
  %v825 = vpop.f32.mrf.mxu0
  %v826 = vadd.f32 %v783, %v825
  %v827 = vpop.f32.mrf.mxu0
  %v828 = vadd.f32 %v785, %v827
  %829 = vdwg.mxu0
  %830 = vmatprep.subr.bf16.mxu0 %v595
  %831 = vmatpush1.bf16.msra.mxu0 %v594
  %832 = vmatprep.subr.bf16.mxu0 %v593
  %833 = vmatpush1.bf16.msra.mxu0 %v592
  %834 = vmatprep.subr.bf16.mxu0 %v591
  %835 = vmatpush1.bf16.msra.mxu0 %v590
  %836 = vmatprep.subr.bf16.mxu0 %v589
  %837 = vmatpush1.bf16.msra.mxu0 %v588
  %838 = vmatprep.subr.bf16.mxu0 %v587
  %839 = vmatpush1.bf16.msra.mxu0 %v586
  %840 = vmatprep.subr.bf16.mxu0 %v585
  %841 = vmatpush1.bf16.msra.mxu0 %v584
  %842 = vmatprep.subr.bf16.mxu0 %v583
  %843 = vmatpush1.bf16.msra.mxu0 %v582
  %844 = vmatprep.subr.bf16.mxu0 %v581
  %845 = vmatpush1.bf16.msra.mxu0 %v580
  %846 = vmatprep.subr.bf16.mxu0 %v611
  %847 = vmatpush2.bf16.msra.mxu0 %v610
  %848 = vmatprep.subr.bf16.mxu0 %v609
  %849 = vmatpush2.bf16.msra.mxu0 %v608
  %850 = vmatprep.subr.bf16.mxu0 %v607
  %851 = vmatpush2.bf16.msra.mxu0 %v606
  %852 = vmatprep.subr.bf16.mxu0 %v605
  %853 = vmatpush2.bf16.msra.mxu0 %v604
  %854 = vmatprep.subr.bf16.mxu0 %v603
  %855 = vmatpush2.bf16.msra.mxu0 %v602
  %856 = vmatprep.subr.bf16.mxu0 %v601
  %857 = vmatpush2.bf16.msra.mxu0 %v600
  %858 = vmatprep.subr.bf16.mxu0 %v599
  %859 = vmatpush2.bf16.msra.mxu0 %v598
  %860 = vmatprep.subr.bf16.mxu0 %v597
  %861 = vmatpush2.bf16.msra.mxu0 %v596
  %862 = vmatprep.mubr.bf16.mxu0 %v193
  %863 = vmatmul.mubr.bf16.gmra.mxu0 %v192
  %v864 = vpop.f32.mrf.mxu0
  %v865 = vadd.f32 %v822, %v864
  %v866 = vpop.f32.mrf.mxu0
  %v867 = vadd.f32 %v824, %v866
  %v868 = vpop.f32.mrf.mxu0
  %v869 = vadd.f32 %v826, %v868
  %v870 = vpop.f32.mrf.mxu0
  %v871 = vadd.f32 %v828, %v870
  %872 = vdwg.mxu0
  %873 = vmatprep.subr.bf16.mxu0 0
  %874 = vmatpush1.bf16.msra.mxu0 0
  %875 = vmatprep.subr.bf16.mxu0 0
  %876 = vmatpush1.bf16.msra.mxu0 0
  %877 = vmatprep.subr.bf16.mxu0 %v742
  %878 = vmatpush1.bf16.msra.mxu0 %v739
  %879 = vmatprep.subr.bf16.mxu0 %v621
  %880 = vmatpush1.bf16.msra.mxu0 %v620
  %881 = vmatprep.subr.bf16.mxu0 %v619
  %882 = vmatpush1.bf16.msra.mxu0 %v618
  %883 = vmatprep.subr.bf16.mxu0 %v617
  %884 = vmatpush1.bf16.msra.mxu0 %v616
  %885 = vmatprep.subr.bf16.mxu0 %v615
  %886 = vmatpush1.bf16.msra.mxu0 %v614
  %887 = vmatprep.subr.bf16.mxu0 %v613
  %888 = vmatpush1.bf16.msra.mxu0 %v612
  %889 = vmatprep.subr.bf16.mxu0 0
  %890 = vmatpush2.bf16.msra.mxu0 0
  %891 = vmatprep.subr.bf16.mxu0 0
  %892 = vmatpush2.bf16.msra.mxu0 0
  %893 = vmatprep.subr.bf16.mxu0 0
  %894 = vmatpush2.bf16.msra.mxu0 0
  %895 = vmatprep.subr.bf16.mxu0 0
  %896 = vmatpush2.bf16.msra.mxu0 0
  %897 = vmatprep.subr.bf16.mxu0 0
  %898 = vmatpush2.bf16.msra.mxu0 0
  %899 = vmatprep.subr.bf16.mxu0 0
  %900 = vmatpush2.bf16.msra.mxu0 0
  %901 = vmatprep.subr.bf16.mxu0 0
  %902 = vmatpush2.bf16.msra.mxu0 0
  %903 = vmatprep.subr.bf16.mxu0 0
  %904 = vmatpush2.bf16.msra.mxu0 0
  %905 = vmatprep.mubr.bf16.mxu0 0
  %906 = vmatmul.mubr.bf16.gmra.mxu0 %v732
  %v907 = vpop.f32.mrf.mxu0
  %v908 = vadd.f32 %v865, %v907
  %v909 = vpop.f32.mrf.mxu0
  %v910 = vadd.f32 %v867, %v909
  %v911 = vpop.f32.mrf.mxu0
  %v912 = vadd.f32 %v869, %v911
  %v913 = vpop.f32.mrf.mxu0
  %v914 = vadd.f32 %v871, %v913
  %915 = vdwg.mxu0
  %916 = vst [vmem:[#allocation2] sm:$0xff] %v908
  %917 = vst [vmem:[#allocation2 + $0x8] sm:$0xff] %v910
  %918 = vst [vmem:[#allocation2 + $0x10] sm:$0xff] %v912
  %919 = vst [vmem:[#allocation2 + $0x18] sm:$0xff] %v914
  %v920 = vld [vmem:[%s61] sm:$0xff]
  %v921 = vld [vmem:[%s61 + $0x8] sm:$0xff]
  %v922 = vld [vmem:[%s61 + $0x10] sm:$0xff]
  %v923 = vld [vmem:[%s61 + $0x18] sm:$0xff]
  %v924 = vld [vmem:[%s61 + $0x20] sm:$0xff]
  %v925 = vld [vmem:[%s61 + $0x28] sm:$0xff]
  %v926 = vld [vmem:[%s61 + $0x30] sm:$0xff]
  %v927 = vpack.c.bf16 %v920, %v920
  %v928 = vpack.c.bf16 %v921, %v921
  %v929 = vpack.c.bf16 %v922, %v922
  %v930 = vpack.c.bf16 %v923, %v923
  %v931 = vpack.c.bf16 %v924, %v924
  %v932 = vpack.c.bf16 %v925, %v925
  %v933 = vpack.c.bf16 %v926, %v926
  %v935 = vsel %vm730, %v933, 0
  %937 = vmatprep.subr.bf16.mxu0 %v531
  %938 = vmatpush1.bf16.msra.mxu0 %v530
  %939 = vmatprep.subr.bf16.mxu0 %v529
  %940 = vmatpush1.bf16.msra.mxu0 %v528
  %941 = vmatprep.subr.bf16.mxu0 %v527
  %942 = vmatpush1.bf16.msra.mxu0 %v526
  %943 = vmatprep.subr.bf16.mxu0 %v525
  %944 = vmatpush1.bf16.msra.mxu0 %v524
  %945 = vmatprep.subr.bf16.mxu0 %v523
  %946 = vmatpush1.bf16.msra.mxu0 %v522
  %947 = vmatprep.subr.bf16.mxu0 %v521
  %948 = vmatpush1.bf16.msra.mxu0 %v520
  %949 = vmatprep.subr.bf16.mxu0 %v519
  %950 = vmatpush1.bf16.msra.mxu0 %v518
  %951 = vmatprep.subr.bf16.mxu0 %v517
  %952 = vmatpush1.bf16.msra.mxu0 %v516
  %953 = vmatprep.subr.bf16.mxu0 %v547
  %954 = vmatpush2.bf16.msra.mxu0 %v546
  %955 = vmatprep.subr.bf16.mxu0 %v545
  %956 = vmatpush2.bf16.msra.mxu0 %v544
  %957 = vmatprep.subr.bf16.mxu0 %v543
  %958 = vmatpush2.bf16.msra.mxu0 %v542
  %959 = vmatprep.subr.bf16.mxu0 %v541
  %960 = vmatpush2.bf16.msra.mxu0 %v540
  %961 = vmatprep.subr.bf16.mxu0 %v539
  %962 = vmatpush2.bf16.msra.mxu0 %v538
  %963 = vmatprep.subr.bf16.mxu0 %v537
  %964 = vmatpush2.bf16.msra.mxu0 %v536
  %965 = vmatprep.subr.bf16.mxu0 %v535
  %966 = vmatpush2.bf16.msra.mxu0 %v534
  %967 = vmatprep.subr.bf16.mxu0 %v533
  %968 = vmatpush2.bf16.msra.mxu0 %v532
  %969 = vmatprep.mubr.bf16.mxu0 %v928
  %970 = vmatmul.mubr.bf16.gmra.mxu0 %v927
  %v971 = vpop.f32.mrf.mxu0
  %v972 = vadd.f32 0.0, %v971
  %v973 = vpop.f32.mrf.mxu0
  %v974 = vadd.f32 0.0, %v973
  %v975 = vpop.f32.mrf.mxu0
  %v976 = vpop.f32.mrf.mxu0
  %977 = vdwg.mxu0
  %978 = vmatprep.subr.bf16.mxu0 %v563
  %979 = vmatpush1.bf16.msra.mxu0 %v562
  %980 = vmatprep.subr.bf16.mxu0 %v561
  %981 = vmatpush1.bf16.msra.mxu0 %v560
  %982 = vmatprep.subr.bf16.mxu0 %v559
  %983 = vmatpush1.bf16.msra.mxu0 %v558
  %984 = vmatprep.subr.bf16.mxu0 %v557
  %985 = vmatpush1.bf16.msra.mxu0 %v556
  %986 = vmatprep.subr.bf16.mxu0 %v555
  %987 = vmatpush1.bf16.msra.mxu0 %v554
  %988 = vmatprep.subr.bf16.mxu0 %v553
  %989 = vmatpush1.bf16.msra.mxu0 %v552
  %990 = vmatprep.subr.bf16.mxu0 %v551
  %991 = vmatpush1.bf16.msra.mxu0 %v550
  %992 = vmatprep.subr.bf16.mxu0 %v549
  %993 = vmatpush1.bf16.msra.mxu0 %v548
  %994 = vmatprep.subr.bf16.mxu0 %v579
  %995 = vmatpush2.bf16.msra.mxu0 %v578
  %996 = vmatprep.subr.bf16.mxu0 %v577
  %997 = vmatpush2.bf16.msra.mxu0 %v576
  %998 = vmatprep.subr.bf16.mxu0 %v575
  %999 = vmatpush2.bf16.msra.mxu0 %v574
  %1000 = vmatprep.subr.bf16.mxu0 %v573
  %1001 = vmatpush2.bf16.msra.mxu0 %v572
  %1002 = vmatprep.subr.bf16.mxu0 %v571
  %1003 = vmatpush2.bf16.msra.mxu0 %v570
  %1004 = vmatprep.subr.bf16.mxu0 %v569
  %1005 = vmatpush2.bf16.msra.mxu0 %v568
  %1006 = vmatprep.subr.bf16.mxu0 %v567
  %1007 = vmatpush2.bf16.msra.mxu0 %v566
  %1008 = vmatprep.subr.bf16.mxu0 %v565
  %1009 = vmatpush2.bf16.msra.mxu0 %v564
  %1010 = vmatprep.mubr.bf16.mxu0 %v930
  %1011 = vmatmul.mubr.bf16.gmra.mxu0 %v929
  %v1012 = vpop.f32.mrf.mxu0
  %v1013 = vadd.f32 %v972, %v1012
  %v1014 = vpop.f32.mrf.mxu0
  %v1015 = vadd.f32 %v974, %v1014
  %v1016 = vpop.f32.mrf.mxu0
  %v1017 = vpop.f32.mrf.mxu0
  %1018 = vdwg.mxu0
  %1019 = vmatprep.subr.bf16.mxu0 %v595
  %1020 = vmatpush1.bf16.msra.mxu0 %v594
  %1021 = vmatprep.subr.bf16.mxu0 %v593
  %1022 = vmatpush1.bf16.msra.mxu0 %v592
  %1023 = vmatprep.subr.bf16.mxu0 %v591
  %1024 = vmatpush1.bf16.msra.mxu0 %v590
  %1025 = vmatprep.subr.bf16.mxu0 %v589
  %1026 = vmatpush1.bf16.msra.mxu0 %v588
  %1027 = vmatprep.subr.bf16.mxu0 %v587
  %1028 = vmatpush1.bf16.msra.mxu0 %v586
  %1029 = vmatprep.subr.bf16.mxu0 %v585
  %1030 = vmatpush1.bf16.msra.mxu0 %v584
  %1031 = vmatprep.subr.bf16.mxu0 %v583
  %1032 = vmatpush1.bf16.msra.mxu0 %v582
  %1033 = vmatprep.subr.bf16.mxu0 %v581
  %1034 = vmatpush1.bf16.msra.mxu0 %v580
  %1035 = vmatprep.subr.bf16.mxu0 %v611
  %1036 = vmatpush2.bf16.msra.mxu0 %v610
  %1037 = vmatprep.subr.bf16.mxu0 %v609
  %1038 = vmatpush2.bf16.msra.mxu0 %v608
  %1039 = vmatprep.subr.bf16.mxu0 %v607
  %1040 = vmatpush2.bf16.msra.mxu0 %v606
  %1041 = vmatprep.subr.bf16.mxu0 %v605
  %1042 = vmatpush2.bf16.msra.mxu0 %v604
  %1043 = vmatprep.subr.bf16.mxu0 %v603
  %1044 = vmatpush2.bf16.msra.mxu0 %v602
  %1045 = vmatprep.subr.bf16.mxu0 %v601
  %1046 = vmatpush2.bf16.msra.mxu0 %v600
  %1047 = vmatprep.subr.bf16.mxu0 %v599
  %1048 = vmatpush2.bf16.msra.mxu0 %v598
  %1049 = vmatprep.subr.bf16.mxu0 %v597
  %1050 = vmatpush2.bf16.msra.mxu0 %v596
  %1051 = vmatprep.mubr.bf16.mxu0 %v932
  %1052 = vmatmul.mubr.bf16.gmra.mxu0 %v931
  %v1053 = vpop.f32.mrf.mxu0
  %v1054 = vadd.f32 %v1013, %v1053
  %v1055 = vpop.f32.mrf.mxu0
  %v1056 = vadd.f32 %v1015, %v1055
  %v1057 = vpop.f32.mrf.mxu0
  %v1058 = vpop.f32.mrf.mxu0
  %1059 = vdwg.mxu0
  %1060 = vmatprep.subr.bf16.mxu0 0
  %1061 = vmatpush1.bf16.msra.mxu0 0
  %1062 = vmatprep.subr.bf16.mxu0 0
  %1063 = vmatpush1.bf16.msra.mxu0 0
  %1064 = vmatprep.subr.bf16.mxu0 %v742
  %1065 = vmatpush1.bf16.msra.mxu0 %v739
  %1066 = vmatprep.subr.bf16.mxu0 %v621
  %1067 = vmatpush1.bf16.msra.mxu0 %v620
  %1068 = vmatprep.subr.bf16.mxu0 %v619
  %1069 = vmatpush1.bf16.msra.mxu0 %v618
  %1070 = vmatprep.subr.bf16.mxu0 %v617
  %1071 = vmatpush1.bf16.msra.mxu0 %v616
  %1072 = vmatprep.subr.bf16.mxu0 %v615
  %1073 = vmatpush1.bf16.msra.mxu0 %v614
  %1074 = vmatprep.subr.bf16.mxu0 %v613
  %1075 = vmatpush1.bf16.msra.mxu0 %v612
  %1076 = vmatprep.subr.bf16.mxu0 0
  %1077 = vmatpush2.bf16.msra.mxu0 0
  %1078 = vmatprep.subr.bf16.mxu0 0
  %1079 = vmatpush2.bf16.msra.mxu0 0
  %1080 = vmatprep.subr.bf16.mxu0 0
  %1081 = vmatpush2.bf16.msra.mxu0 0
  %1082 = vmatprep.subr.bf16.mxu0 0
  %1083 = vmatpush2.bf16.msra.mxu0 0
  %1084 = vmatprep.subr.bf16.mxu0 0
  %1085 = vmatpush2.bf16.msra.mxu0 0
  %1086 = vmatprep.subr.bf16.mxu0 0
  %1087 = vmatpush2.bf16.msra.mxu0 0
  %1088 = vmatprep.subr.bf16.mxu0 0
  %1089 = vmatpush2.bf16.msra.mxu0 0
  %1090 = vmatprep.subr.bf16.mxu0 0
  %1091 = vmatpush2.bf16.msra.mxu0 0
  %1092 = vmatprep.mubr.bf16.mxu0 0
  %1093 = vmatmul.mubr.bf16.gmra.mxu0 %v935
  %v1094 = vpop.f32.mrf.mxu0
  %v1095 = vadd.f32 %v1054, %v1094
  %v1096 = vpop.f32.mrf.mxu0
  %v1097 = vadd.f32 %v1056, %v1096
  %v1098 = vpop.f32.mrf.mxu0
  %v1099 = vpop.f32.mrf.mxu0
  %1100 = vdwg.mxu0
  %1101 = vst [vmem:[#allocation2 + $0x20] sm:$0xff] %v1095
  %1102 = vst [vmem:[#allocation2 + $0x28] sm:$0xff] %v1097
  %v1103 = vld [vmem:[#allocation2] sm:$0xff]
  %v1104 = vld [vmem:[#allocation2 + $0x10] sm:$0xff]
  %v1105 = vld [vmem:[#allocation2] sm:$0xfe]
  %v1106 = vld [vmem:[#allocation2 + $0x20] sm:$0x1]
  %vm1110 = vcmask 1046528
  %v1111 = vrot.slane %v1105, 1
  %v1112 = vrot.slane %v1104, 1
  %v1113 = vsel %vm1110, %v1111, %v1112
  %v1114 = vrot.slane %v1106, 1
  %v1115 = vsel %vm1110, %v1112, %v1114
  %1116 = vrot.lane.b32.xlu0 %v1113, 96
  %v1117 = vpop.permute.xlu0 %1116
  %1118 = vrot.lane.b32.xlu0 %v1115, 96
  %v1119 = vpop.permute.xlu0 %1118
  %v1122 = vadd.f32 %v1103, %v1117
  %v1123 = vadd.f32 %v1104, %v1119
  %v1124 = vld [vmem:[#allocation2] sm:$0xfc]
  %v1125 = vld [vmem:[#allocation2 + $0x20] sm:$0x3]
  %vm1128 = vcmask 1045504
  %v1129 = vrot.slane %v1124, 2
  %v1130 = vrot.slane %v1104, 2
  %v1131 = vsel %vm1128, %v1129, %v1130
  %v1132 = vrot.slane %v1125, 2
  %v1133 = vsel %vm1128, %v1130, %v1132
  %1134 = vrot.lane.b32.xlu0 %v1131, 64
  %v1135 = vpop.permute.xlu0 %1134
  %1136 = vrot.lane.b32.xlu0 %v1133, 64
  %v1137 = vpop.permute.xlu0 %1136
  %v1140 = vadd.f32 %v1122, %v1135
  %v1141 = vadd.f32 %v1123, %v1137
  %v1142 = vld [vmem:[#allocation2] sm:$0xf8]
  %v1143 = vld [vmem:[#allocation2 + $0x20] sm:$0x7]
  %vm1146 = vcmask 1044480
  %v1147 = vrot.slane %v1142, 3
  %v1148 = vrot.slane %v1104, 3
  %v1149 = vsel %vm1146, %v1147, %v1148
  %v1150 = vrot.slane %v1143, 3
  %v1151 = vsel %vm1146, %v1148, %v1150
  %1152 = vrot.lane.b32.xlu0 %v1149, 32
  %v1153 = vpop.permute.xlu0 %1152
  %1154 = vrot.lane.b32.xlu0 %v1151, 32
  %v1155 = vpop.permute.xlu0 %1154
  %v1158 = vadd.f32 %v1140, %v1153
  %v1159 = vadd.f32 %v1141, %v1155
  %v1160 = vld [vmem:[#allocation2 + $0x8] sm:$0xf0]
  %v1161 = vld [vmem:[#allocation2 + $0x18] sm:$0xff]
  %v1162 = vld [vmem:[#allocation2 + $0x28] sm:$0xf]
  %vm1166 = vcmask 1043456
  %v1167 = vrot.slane %v1160, 4
  %v1168 = vrot.slane %v1161, 4
  %v1169 = vsel %vm1166, %v1167, %v1168
  %v1170 = vrot.slane %v1162, 4
  %v1171 = vsel %vm1166, %v1168, %v1170
  %v1174 = vadd.f32 %v1158, %v1169
  %v1175 = vadd.f32 %v1159, %v1171
  %v1176 = vld [vmem:[#allocation2 + $0x8] sm:$0xe0]
  %v1177 = vld [vmem:[#allocation2 + $0x28] sm:$0x1f]
  %v1180 = vrot.slane %v1176, 5
  %v1181 = vrot.slane %v1161, 5
  %v1182 = vsel %vm735, %v1180, %v1181
  %v1183 = vrot.slane %v1177, 5
  %v1184 = vsel %vm735, %v1181, %v1183
  %1185 = vrot.lane.b32.xlu0 %v1182, 96
  %v1186 = vpop.permute.xlu0 %1185
  %1187 = vrot.lane.b32.xlu0 %v1184, 96
  %v1188 = vpop.permute.xlu0 %1187
  %v1191 = vadd.f32 %v1174, %v1186
  %v1192 = vadd.f32 %v1175, %v1188
  %v1193 = vld [vmem:[#allocation2 + $0x8] sm:$0xc0]
  %v1194 = vld [vmem:[#allocation2 + $0x28] sm:$0x3f]
  %v1197 = vrot.slane %v1193, 6
  %v1198 = vrot.slane %v1161, 6
  %v1199 = vsel %vm734, %v1197, %v1198
  %v1200 = vrot.slane %v1194, 6
  %v1201 = vsel %vm734, %v1198, %v1200
  %1202 = vrot.lane.b32.xlu0 %v1199, 64
  %v1203 = vpop.permute.xlu0 %1202
  %1204 = vrot.lane.b32.xlu0 %v1201, 64
  %v1205 = vpop.permute.xlu0 %1204
  %v1208 = vadd.f32 %v1191, %v1203
  %v1209 = vadd.f32 %v1192, %v1205
  %v1210 = vld [vmem:[#allocation2 + $0x8] sm:$0x80]
  %v1211 = vld [vmem:[#allocation2 + $0x28] sm:$0x7f]
  %vm1214 = vcmask 1040384
  %v1215 = vrot.slane %v1210, 7
  %v1216 = vrot.slane %v1161, 7
  %v1217 = vsel %vm1214, %v1215, %v1216
  %v1218 = vrot.slane %v1211, 7
  %v1219 = vsel %vm1214, %v1216, %v1218
  %1220 = vrot.lane.b32.xlu0 %v1217, 32
  %v1221 = vpop.permute.xlu0 %1220
  %1222 = vrot.lane.b32.xlu0 %v1219, 32
  %v1223 = vpop.permute.xlu0 %1222
  %v1226 = vadd.f32 %v1208, %v1221
  %v1227 = vadd.f32 %v1209, %v1223
  %v1228 = vld [vmem:[%s3] sm:$0x1]
  %v1230 = vlaneseq
  %v1231 = vshrl.u32 %v1230, 7
  %v1232 = vsub.s32 0, %v1231
  %v1233 = vrot.slane %v1228, %v1232
  %v1235 = vadd.f32 %v1226, %v1233
  %v1236 = vadd.f32 %v1227, %v1233
  %v1237 = vmax.f32 %v1235, 0.0
  %v1238 = vmax.f32 %v1236, 0.0
  %1241 = vrot.lane.b32.xlu0 %v1237, 112
  %v1242 = vpop.permute.xlu0 %1241
  %1243 = vrot.lane.b32.xlu0 %v1238, 112
  %v1244 = vpop.permute.xlu0 %1243
  %v1247 = vmax.f32 %v1237, %v1242
  %v1248 = vmax.f32 %v1238, %v1244
  %v1249 = vld [vmem:[%s4] sm:$0xff]
  %v1250 = vld [vmem:[%s4 + $0x8] sm:$0xff]
  %v1251 = vld [vmem:[%s5] sm:$0x1]
  %v1253 = vlaneseq
  %v1254 = vshrl.u32 %v1253, 7
  %v1255 = vsub.s32 0, %v1254
  %v1256 = vrot.slane %v1251, %v1255
  %vm1258 = vcmask 130048
  %v1260 = vsel %vm1258, %v1247, 0
  %v1263 = vsel %vm1258, %v1248, 0
  %1265 = vmatprep.subr.mxu0 0.0
  %1266 = vmatpush1.msra.mxu0 0.0
  %1267 = vmatprep.subr.mxu0 0.0
  %1268 = vmatpush1.msra.mxu0 0.0
  %1269 = vmatprep.subr.mxu0 0.0
  %1270 = vmatpush1.msra.mxu0 0.0
  %1271 = vmatprep.subr.mxu0 0.0
  %1272 = vmatpush1.msra.mxu0 0.0
  %1273 = vmatprep.subr.mxu0 0.0
  %1274 = vmatpush1.msra.mxu0 0.0
  %1275 = vmatprep.subr.mxu0 0.0
  %1276 = vmatpush1.msra.mxu0 0.0
  %1277 = vmatprep.subr.mxu0 0.0
  %1278 = vmatpush1.msra.mxu0 0.0
  %1279 = vmatprep.subr.mxu0 0.0
  %1280 = vmatpush1.msra.mxu0 0.0
  %1281 = vmatprep.subr.mxu0 0.0
  %1282 = vmatpush1.msra.mxu0 0.0
  %1283 = vmatprep.subr.mxu0 0.0
  %1284 = vmatpush1.msra.mxu0 0.0
  %1285 = vmatprep.subr.mxu0 0.0
  %1286 = vmatpush1.msra.mxu0 0.0
  %1287 = vmatprep.subr.mxu0 0.0
  %1288 = vmatpush1.msra.mxu0 0.0
  %1289 = vmatprep.subr.mxu0 0.0
  %1290 = vmatpush1.msra.mxu0 0.0
  %1291 = vmatprep.subr.mxu0 0.0
  %1292 = vmatpush1.msra.mxu0 0.0
  %1293 = vmatprep.subr.mxu0 0.0
  %1294 = vmatpush1.msra.mxu0 %v1250
  %1295 = vmatprep.subr.mxu0 0.0
  %1296 = vmatpush1.msra.mxu0 %v1249
  %1297 = vmatprep.subr.mxu0 0.0
  %1298 = vmatpush2.msra.mxu0 0.0
  %1299 = vmatprep.subr.mxu0 0.0
  %1300 = vmatpush2.msra.mxu0 0.0
  %1301 = vmatprep.subr.mxu0 0.0
  %1302 = vmatpush2.msra.mxu0 0.0
  %1303 = vmatprep.subr.mxu0 0.0
  %1304 = vmatpush2.msra.mxu0 0.0
  %1305 = vmatprep.subr.mxu0 0.0
  %1306 = vmatpush2.msra.mxu0 0.0
  %1307 = vmatprep.subr.mxu0 0.0
  %1308 = vmatpush2.msra.mxu0 0.0
  %1309 = vmatprep.subr.mxu0 0.0
  %1310 = vmatpush2.msra.mxu0 0.0
  %1311 = vmatprep.subr.mxu0 0.0
  %1312 = vmatpush2.msra.mxu0 0.0
  %1313 = vmatprep.subr.mxu0 0.0
  %1314 = vmatpush2.msra.mxu0 0.0
  %1315 = vmatprep.subr.mxu0 0.0
  %1316 = vmatpush2.msra.mxu0 0.0
  %1317 = vmatprep.subr.mxu0 0.0
  %1318 = vmatpush2.msra.mxu0 0.0
  %1319 = vmatprep.subr.mxu0 0.0
  %1320 = vmatpush2.msra.mxu0 0.0
  %1321 = vmatprep.subr.mxu0 0.0
  %1322 = vmatpush2.msra.mxu0 0.0
  %1323 = vmatprep.subr.mxu0 0.0
  %1324 = vmatpush2.msra.mxu0 0.0
  %1325 = vmatprep.subr.mxu0 0.0
  %1326 = vmatpush2.msra.mxu0 0.0
  %1327 = vmatprep.subr.mxu0 0.0
  %1328 = vmatpush2.msra.mxu0 0.0
  %1329 = vmatprep.mubr.f32.mxu0 0.0
  %1330 = vmatmul.mubr.f32.gmra.mxu0 %v1260
  %v1331 = vpop.f32.mrf.mxu0
  %v1332 = vadd.f32 %v1256, %v1331
  %v1333 = vpop.f32.mrf.mxu0
  %1334 = vmatprep.mubr.f32.mxu0 0.0
  %1335 = vmatmul.mubr.f32.gmra.mxu0 %v1263
  %v1336 = vpop.f32.mrf.mxu0
  %v1337 = vadd.f32 %v1256, %v1336
  %v1338 = vpop.f32.mrf.mxu0
  %1339 = vdwg.mxu0
  %v1340 = vmax.f32 %v1332, 0.0
  %v1341 = vmax.f32 %v1337, 0.0
  %v1342 = vld [vmem:[%s6] sm:$0x1]
  %v1344 = vlaneseq
  %v1345 = vshrl.u32 %v1344, 7
  %v1346 = vsub.s32 0, %v1345
  %v1347 = vrot.slane %v1342, %v1346
  %v1349 = vmul.f32 %v1340, %v1347
  %v1350 = vmul.f32 %v1341, %v1347
  %vm1351 = vcmask 80896
  %v1352 = vsel %vm1351, %v1349, 0.0
  %1353 = vadd.xlane.f32.xlu0 %v1352
  %v1354 = vpop.xlane.xlu0 %1353
  %v1355 = vsel %vm1351, %v1350, 0.0
  %1356 = vadd.xlane.f32.xlu0 %v1355
  %v1357 = vpop.xlane.xlu0 %1356
  %v1358 = vld [vmem:[#allocation3] sm:$0x1]
  %v1360 = vlaneseq
  %v1361 = vshrl.u32 %v1360, 7
  %v1362 = vsub.s32 0, %v1361
  %v1363 = vrot.slane %v1358, %v1362
  %v1365 = vadd.f32 %v1354, %v1363
  %v1366 = vadd.f32 %v1357, %v1363
  %v1367 = vxor.u32 %v1365, 2147483648
  %v1368 = vxor.u32 %v1366, 2147483648
  %v1369 = vmul.f32 %v1367, 1.442695
  %v1370 = vpow.pop %v1369
  %v1371 = vmul.f32 %v1368, 1.442695
  %v1372 = vpow.pop %v1371
  %v1373 = vadd.f32 %v1370, 1.0
  %v1374 = vadd.f32 %v1372, 1.0
  %v1375 = vrcp.pop %v1373
  %v1376 = vmul.f32 1.0, %v1375
  %v1377 = vrcp.pop %v1374
  %v1378 = vmul.f32 1.0, %v1377
  %vm1379 = vcmask 7168
  %1380 = vst.msk [vmem:[%s8] sm:$0xff] %vm1379, %v1376
  %1381 = vst.msk [vmem:[%s8 + $0x8] sm:$0xff] %vm1379, %v1378
  // Predicated region
  $region34: #{net_forward.1} parent=0 // pred_check
    _
  $region35: #{net_forward.1} parent=0 // pred_check_branch
    %1383 = sbr.rel (0) target = $region37
  $region36: #{net_forward.1} parent=0 // pred_region
    _
  $region37: #{net_forward.1} parent=0 // pred_fallthru
    _
  // Predicated region
  $region38: #{net_forward.1} parent=0 // pred_check
    _
  $region39: #{net_forward.1} parent=0 // pred_check_branch
    %1385 = sbr.rel (0) target = $region41
  $region40: #{net_forward.1} parent=0 // pred_region
    _
  $region41: #{net_forward.1} parent=0 // pred_fallthru
    _

</llo_original>
